<compile_context>
chip_gen: v7x
topology: tpu7x:2x2x1
jax: 0.10.0
libtpu: 0.0.40
codegen_flags: <defaults>
</compile_context>

<pallas_src>
import functools

import jax
import jax.numpy as jnp
import numpy as np
from jax.experimental import pallas as pl
from jax.experimental.pallas import tpu as pltpu


def _round_up(v, m):
    return (v + m - 1) // m * m


def discrete_vae_kernel(
    xc_ref,       # (bm, SL)       cat(x, c) activation block
    w_ref,        # (n_rows, 2H)   packed weight + bias slab (see wrapper layout)
    out_ref,      # (bm, out_w)    packed lane-dense output slab
    *, SL, L, H, A, inv_temp, r_w1c, r_pw2, r_qw2, r_pw3, r_qw3, r_b, out_w,
):
    xc = xc_ref[...]                                         # (bm, SL)

    # Packed biases (single-sublane views into the slab's bias rows).
    pb1 = w_ref[r_b + 0:r_b + 1, 0:H]
    pb2 = w_ref[r_b + 1:r_b + 2, 0:H]
    pb3 = w_ref[r_b + 2:r_b + 3, 0:L]
    qb1 = w_ref[r_b + 3:r_b + 4, 0:H]
    qb2 = w_ref[r_b + 4:r_b + 5, 0:H]
    qb3 = w_ref[r_b + 5:r_b + 6, 0:A]

    # ---- Fused layer 1: posterior (cols 0:H) + policy x-part (cols H:2H) ----
    # The c-rows of the policy half are zero, so only x contributes to gx.
    fused = jnp.dot(xc, w_ref[0:SL, :], preferred_element_type=jnp.float32)
    h = jnp.tanh(fused[:, 0:H] + pb1)                        # posterior hidden 1
    gx = fused[:, H:2 * H]                                   # policy layer-1, x part (pre-bias)

    # ---- DiscretePosterior layers 2-3 ----
    h = jnp.tanh(
        jnp.dot(h, w_ref[r_pw2:r_pw2 + H, 0:H], preferred_element_type=jnp.float32) + pb2
    )
    logits = (
        jnp.dot(h, w_ref[r_pw3:r_pw3 + H, 0:L], preferred_element_type=jnp.float32) + pb3
    )

    # ---- reparameterize (eval): softmax(logits / T, dim=1) ----
    z = logits * inv_temp
    z = z - jnp.max(z, axis=1, keepdims=True)
    e = jnp.exp(z)
    s = jnp.sum(e, axis=1, keepdims=True)
    r = pl.reciprocal(s, approx=True)                        # EUP slot
    r = r * (2.0 - s * r)                                    # one Newton refinement
    probs = e * r

    # ---- Policy: split layer-1 (x part precomputed) -> tanh -> linear head ----
    g = jnp.tanh(
        gx
        + jnp.dot(probs, w_ref[r_w1c:r_w1c + L, 0:H], preferred_element_type=jnp.float32)
        + qb1
    )
    g = jnp.tanh(
        jnp.dot(g, w_ref[r_qw2:r_qw2 + H, 0:H], preferred_element_type=jnp.float32) + qb2
    )
    act = (
        jnp.dot(g, w_ref[r_qw3:r_qw3 + H, 0:A], preferred_element_type=jnp.float32) + qb3
    )

    # ---- single full unmasked output store: [act | logits | probs | 0-pad] ----
    pieces = [act, logits, probs]
    pad_w = out_w - (A + 2 * L)
    if pad_w:
        pieces.append(jnp.zeros((act.shape[0], pad_w), jnp.float32))
    out_ref[...] = jnp.concatenate(pieces, axis=1)


def discrete_vae_forward(x, c, params, temperature):
    B, S = x.shape
    _, L = c.shape
    H = params["pw2"].shape[0]
    A = params["qw3"].shape[1]
    SL = S + L
    assert L <= H and A <= H, "packed slab assumes head widths <= hidden"
    assert H <= 128, "packed slab assumes hidden <= 128"

    f32 = jnp.float32
    # Pre-concatenate cat(x, c) once (posterior layer-1 operand).
    xc = jnp.concatenate([x, c], axis=1).astype(f32)

    # ---- one packed weight + bias slab, all sub-blocks 8-row aligned -------
    #   rows [0, SL)          cols [0,H)   = pw1        (posterior layer 1)
    #   rows [0, S)           cols [H,2H)  = qw1[:S]    (policy layer 1, x part; c rows zero)
    #   rows [r_w1c, +L)      cols [0,H)   = qw1[S:]    (policy layer 1, probs part)
    #   rows [r_pw2, +H)      cols [0,H)   = pw2
    #   rows [r_qw2, +H)      cols [0,H)   = qw2
    #   rows [r_pw3, +H)      cols [0,L)   = pw3
    #   rows [r_qw3, +H)      cols [0,A)   = qw3
    #   rows [r_b, r_b+8)                  = pb1, pb2, pb3, qb1, qb2, qb3
    r_w1c = _round_up(SL, 8)
    r_pw2 = r_w1c + _round_up(L, 8)
    r_qw2 = r_pw2 + _round_up(H, 8)
    r_pw3 = r_qw2 + _round_up(H, 8)
    r_qw3 = r_pw3 + _round_up(H, 8)
    r_b = r_qw3 + _round_up(H, 8)
    n_rows = r_b + 8

    w = jnp.zeros((n_rows, 2 * H), f32)
    w = w.at[0:SL, 0:H].set(params["pw1"].astype(f32))
    w = w.at[0:S, H:2 * H].set(params["qw1"][0:S].astype(f32))
    w = w.at[r_w1c:r_w1c + L, 0:H].set(params["qw1"][S:SL].astype(f32))
    w = w.at[r_pw2:r_pw2 + H, 0:H].set(params["pw2"].astype(f32))
    w = w.at[r_qw2:r_qw2 + H, 0:H].set(params["qw2"].astype(f32))
    w = w.at[r_pw3:r_pw3 + H, 0:L].set(params["pw3"].astype(f32))
    w = w.at[r_qw3:r_qw3 + H, 0:A].set(params["qw3"].astype(f32))
    w = w.at[r_b + 0, 0:H].set(params["pb1"].reshape(-1).astype(f32))
    w = w.at[r_b + 1, 0:H].set(params["pb2"].reshape(-1).astype(f32))
    w = w.at[r_b + 2, 0:L].set(params["pb3"].reshape(-1).astype(f32))
    w = w.at[r_b + 3, 0:H].set(params["qb1"].reshape(-1).astype(f32))
    w = w.at[r_b + 4, 0:H].set(params["qb2"].reshape(-1).astype(f32))
    w = w.at[r_b + 5, 0:A].set(params["qb3"].reshape(-1).astype(f32))

    # Lane-dense packed output slab: [act | logits | probs | zero pad to 128k].
    out_w = _round_up(A + 2 * L, 128)

    # ---- batch tiling: pad B up to a multiple of bm (bm <= 256, 8-aligned) --
    bm = min(_round_up(B, 8), 256)
    B_pad = _round_up(B, bm)
    if B_pad != B:
        xc = jnp.pad(xc, ((0, B_pad - B), (0, 0)))
    grid = (B_pad // bm,)

    kernel = functools.partial(
        discrete_vae_kernel,
        SL=SL, L=L, H=H, A=A,
        inv_temp=float(1.0 / temperature),
        r_w1c=r_w1c, r_pw2=r_pw2, r_qw2=r_qw2, r_pw3=r_pw3, r_qw3=r_qw3,
        r_b=r_b, out_w=out_w,
    )

    out = pl.pallas_call(
        kernel,
        out_shape=jax.ShapeDtypeStruct((B_pad, out_w), jnp.float32),
        grid_spec=pltpu.PrefetchScalarGridSpec(
            num_scalar_prefetch=0,
            grid=grid,
            in_specs=[
                pl.BlockSpec((bm, SL), lambda i: (i, 0)),
                pl.BlockSpec((n_rows, 2 * H), lambda i: (0, 0)),
            ],
            out_specs=pl.BlockSpec((bm, out_w), lambda i: (i, 0)),
        ),
        compiler_params=pltpu.CompilerParams(
            dimension_semantics=("parallel",)),
    )(xc, w)

    action_mean = out[:B, 0:A]
    c_logits = out[:B, A:A + L]
    c_new = out[:B, A + L:A + 2 * L]
    # PyTorch forward returns (decoder_output_1, decoder_output_2=None, c_logits);
    # c is mutated in place in torch, so we also return the updated c.
    return (action_mean, None, c_logits), c_new


def init_params(key, S, L, H, A):
    """Deterministic synthetic weights. Linear weights stored (in, out)."""
    ks = jax.random.split(key, 10)

    def lin(k, fan_in, fan_out):
        bound = 1.0 / np.sqrt(fan_in)
        return jax.random.uniform(k, (fan_in, fan_out), jnp.float32, -bound, bound)

    # DiscretePosterior: Linear(S+L, H) -> Linear(H, H) -> Linear(H, L)
    params = {
        "pw1": lin(ks[0], S + L, H),
        "pb1": jax.random.normal(ks[1], (1, H), jnp.float32) * 0.01,
        "pw2": lin(ks[2], H, H),
        "pb2": jax.random.normal(ks[3], (1, H), jnp.float32) * 0.01,
        "pw3": lin(ks[4], H, L),
        "pb3": jax.random.normal(ks[5], (1, L), jnp.float32) * 0.01,
        # Policy: Linear(S+L, H) -> Linear(H, H) -> Linear(H, A)  (linear head)
        "qw1": lin(ks[6], S + L, H),
        "qb1": jax.random.normal(ks[7], (1, H), jnp.float32) * 0.01,
        "qw2": lin(ks[8], H, H),
        "qb2": jnp.zeros((1, H), jnp.float32),
        "qw3": lin(ks[9], H, A),
        "qb3": jnp.zeros((1, A), jnp.float32),
    }
    return params


def reference_forward(x, c, p, temperature):
    """Pure-JAX reference for validation."""
    xc = jnp.concatenate([x, c], axis=1)
    h = jnp.tanh(xc @ p["pw1"] + p["pb1"])
    h = jnp.tanh(h @ p["pw2"] + p["pb2"])
    logits = h @ p["pw3"] + p["pb3"]
    probs = jax.nn.softmax(logits / temperature, axis=1)
    xcp = jnp.concatenate([x, probs], axis=1)
    g = jnp.tanh(xcp @ p["qw1"] + p["qb1"])
    g = jnp.tanh(g @ p["qw2"] + p["qb2"])
    act = g @ p["qw3"] + p["qb3"]
    return act, logits, probs


if __name__ == "__main__":
    # Small config consistent with the module:
    #   posterior_state_size * history_size = 16, posterior_latent_size = 8,
    #   hidden_size = 32, policy_output_size = 4, batch = 8.
    B, S, L, H, A = 8, 16, 8, 32, 4
    temperature = 5.0

    key = jax.random.PRNGKey(0)
    kx, kp = jax.random.split(key)
    x = jax.random.normal(kx, (B, S), jnp.float32)
    c = -1.0 * jnp.ones((B, L), jnp.float32)          # as built in get_loss()
    params = init_params(kp, S, L, H, A)

    (action_mean, dec2, c_logits), c_new = discrete_vae_forward(
        x, c, params, temperature
    )
    jax.block_until_ready((action_mean, c_logits, c_new))

    ref_act, ref_logits, ref_probs = reference_forward(x, c, params, temperature)
    np.testing.assert_allclose(np.asarray(action_mean), np.asarray(ref_act),
                               rtol=1e-5, atol=1e-5)
    np.testing.assert_allclose(np.asarray(c_logits), np.asarray(ref_logits),
                               rtol=1e-5, atol=1e-5)
    np.testing.assert_allclose(np.asarray(c_new), np.asarray(ref_probs),
                               rtol=1e-5, atol=1e-5)
    assert dec2 is None

    # Ragged-batch path: B not a multiple of 8 exercises the pad + slice logic.
    B2 = 10
    x2 = jax.random.normal(jax.random.PRNGKey(1), (B2, S), jnp.float32)
    c2 = -1.0 * jnp.ones((B2, L), jnp.float32)
    (act2, _, logits2), cnew2 = discrete_vae_forward(x2, c2, params, temperature)
    jax.block_until_ready((act2, logits2, cnew2))
    r_act2, r_log2, r_prob2 = reference_forward(x2, c2, params, temperature)
    np.testing.assert_allclose(np.asarray(act2), np.asarray(r_act2),
                               rtol=1e-5, atol=1e-5)
    np.testing.assert_allclose(np.asarray(logits2), np.asarray(r_log2),
                               rtol=1e-5, atol=1e-5)
    np.testing.assert_allclose(np.asarray(cnew2), np.asarray(r_prob2),
                               rtol=1e-5, atol=1e-5)

    print("KERNEL_OK")
</pallas_src>

<mosaic_0001>
module attributes {stable_mosaic.version = 11 : i64} {
  func.func @discrete_vae_kernel(%arg0: i32, %arg1: memref<8x24xf32, #tpu.memory_space<vmem>>, %arg2: memref<168x64xf32, #tpu.memory_space<vmem>>, %arg3: memref<8x128xf32, #tpu.memory_space<vmem>>) attributes {dimension_semantics = [#tpu.dimension_semantics<parallel>], iteration_bounds = array<i64: 1>, scalar_prefetch = 0 : i64, scratch_operands = 0 : i64, tpu.core_type = #tpu.core_type<tc>, window_params = [{transform_indices = @transform_0, window_bounds = array<i64: 8, 24>}, {pipeline_mode = #tpu.pipeline_mode<synchronous>, transform_indices = @transform_1, window_bounds = array<i64: 168, 64>}, {transform_indices = @transform_2, window_bounds = array<i64: 8, 128>}]} {
    %c0 = arith.constant 0 : index
    %c0_0 = arith.constant 0 : index
    %0 = vector.load %arg1[%c0, %c0_0] : memref<8x24xf32, #tpu.memory_space<vmem>>, vector<8x24xf32>
    %c160 = arith.constant 160 : index
    %c0_1 = arith.constant 0 : index
    %1 = vector.load %arg2[%c160, %c0_1] : memref<168x64xf32, #tpu.memory_space<vmem>>, vector<1x32xf32>
    %c161 = arith.constant 161 : index
    %c0_2 = arith.constant 0 : index
    %2 = vector.load %arg2[%c161, %c0_2] : memref<168x64xf32, #tpu.memory_space<vmem>>, vector<1x32xf32>
    %c162 = arith.constant 162 : index
    %c0_3 = arith.constant 0 : index
    %3 = vector.load %arg2[%c162, %c0_3] : memref<168x64xf32, #tpu.memory_space<vmem>>, vector<1x8xf32>
    %c163 = arith.constant 163 : index
    %c0_4 = arith.constant 0 : index
    %4 = vector.load %arg2[%c163, %c0_4] : memref<168x64xf32, #tpu.memory_space<vmem>>, vector<1x32xf32>
    %c164 = arith.constant 164 : index
    %c0_5 = arith.constant 0 : index
    %5 = vector.load %arg2[%c164, %c0_5] : memref<168x64xf32, #tpu.memory_space<vmem>>, vector<1x32xf32>
    %c165 = arith.constant 165 : index
    %c0_6 = arith.constant 0 : index
    %6 = vector.load %arg2[%c165, %c0_6] : memref<168x64xf32, #tpu.memory_space<vmem>>, vector<1x4xf32>
    %c0_7 = arith.constant 0 : index
    %c0_8 = arith.constant 0 : index
    %7 = vector.load %arg2[%c0_7, %c0_8] : memref<168x64xf32, #tpu.memory_space<vmem>>, vector<24x64xf32>
    %cst = arith.constant dense<0.000000e+00> : vector<8x64xf32>
    %8 = tpu.matmul %0, %7, %cst {dimension_numbers = #tpu.dot_dimension_numbers<[1], [0], [0], [1], [0, 0, 1, 1], [], []>} : vector<8x24xf32>, vector<24x64xf32>, vector<8x64xf32> -> vector<8x64xf32>
    %9 = vector.extract_strided_slice %8 {offsets = [0, 0], sizes = [8, 32], strides = [1, 1]} : vector<8x64xf32> to vector<8x32xf32>
    %10 = vector.broadcast %1 : vector<1x32xf32> to vector<8x32xf32>
    %11 = arith.addf %9, %10 : vector<8x32xf32>
    %12 = math.tanh %11 : vector<8x32xf32>
    %13 = vector.extract_strided_slice %8 {offsets = [0, 32], sizes = [8, 32], strides = [1, 1]} : vector<8x64xf32> to vector<8x32xf32>
    %c32 = arith.constant 32 : index
    %c0_9 = arith.constant 0 : index
    %14 = vector.load %arg2[%c32, %c0_9] : memref<168x64xf32, #tpu.memory_space<vmem>>, vector<32x32xf32>
    %cst_10 = arith.constant dense<0.000000e+00> : vector<8x32xf32>
    %15 = tpu.matmul %12, %14, %cst_10 {dimension_numbers = #tpu.dot_dimension_numbers<[1], [0], [0], [1], [0, 0, 1, 1], [], []>} : vector<8x32xf32>, vector<32x32xf32>, vector<8x32xf32> -> vector<8x32xf32>
    %16 = vector.broadcast %2 : vector<1x32xf32> to vector<8x32xf32>
    %17 = arith.addf %15, %16 : vector<8x32xf32>
    %18 = math.tanh %17 : vector<8x32xf32>
    %c96 = arith.constant 96 : index
    %c0_11 = arith.constant 0 : index
    %19 = vector.load %arg2[%c96, %c0_11] : memref<168x64xf32, #tpu.memory_space<vmem>>, vector<32x8xf32>
    %cst_12 = arith.constant dense<0.000000e+00> : vector<8x8xf32>
    %20 = tpu.matmul %18, %19, %cst_12 {dimension_numbers = #tpu.dot_dimension_numbers<[1], [0], [0], [1], [0, 0, 1, 1], [], []>} : vector<8x32xf32>, vector<32x8xf32>, vector<8x8xf32> -> vector<8x8xf32>
    %21 = vector.broadcast %3 : vector<1x8xf32> to vector<8x8xf32>
    %22 = arith.addf %20, %21 : vector<8x8xf32>
    %cst_13 = arith.constant 2.000000e-01 : f32
    %23 = vector.broadcast %cst_13 : f32 to vector<8x8xf32>
    %24 = arith.mulf %22, %23 : vector<8x8xf32>
    %cst_14 = arith.constant dense<0xFF800000> : vector<8xf32>
    %25 = vector.multi_reduction <maximumf>, %24, %cst_14 [1] : vector<8x8xf32> to vector<8xf32>
    %26 = vector.shape_cast %25 : vector<8xf32> to vector<8x1xf32>
    %27 = vector.broadcast %26 : vector<8x1xf32> to vector<8x8xf32>
    %28 = arith.subf %24, %27 : vector<8x8xf32>
    %29 = math.exp %28 : vector<8x8xf32>
    %cst_15 = arith.constant dense<0.000000e+00> : vector<8xf32>
    %30 = vector.multi_reduction <add>, %29, %cst_15 [1] : vector<8x8xf32> to vector<8xf32>
    %31 = vector.shape_cast %30 : vector<8xf32> to vector<8x1xf32>
    %32 = tpu.reciprocal %31 {approx = true} : vector<8x1xf32> -> vector<8x1xf32>
    %33 = arith.mulf %31, %32 : vector<8x1xf32>
    %cst_16 = arith.constant 2.000000e+00 : f32
    %34 = vector.broadcast %cst_16 : f32 to vector<8x1xf32>
    %35 = arith.subf %34, %33 : vector<8x1xf32>
    %36 = arith.mulf %32, %35 : vector<8x1xf32>
    %37 = vector.broadcast %36 : vector<8x1xf32> to vector<8x8xf32>
    %38 = arith.mulf %29, %37 : vector<8x8xf32>
    %c24 = arith.constant 24 : index
    %c0_17 = arith.constant 0 : index
    %39 = vector.load %arg2[%c24, %c0_17] : memref<168x64xf32, #tpu.memory_space<vmem>>, vector<8x32xf32>
    %cst_18 = arith.constant dense<0.000000e+00> : vector<8x32xf32>
    %40 = tpu.matmul %38, %39, %cst_18 {dimension_numbers = #tpu.dot_dimension_numbers<[1], [0], [0], [1], [0, 0, 1, 1], [], []>} : vector<8x8xf32>, vector<8x32xf32>, vector<8x32xf32> -> vector<8x32xf32>
    %41 = arith.addf %13, %40 : vector<8x32xf32>
    %42 = vector.broadcast %4 : vector<1x32xf32> to vector<8x32xf32>
    %43 = arith.addf %41, %42 : vector<8x32xf32>
    %44 = math.tanh %43 : vector<8x32xf32>
    %c64 = arith.constant 64 : index
    %c0_19 = arith.constant 0 : index
    %45 = vector.load %arg2[%c64, %c0_19] : memref<168x64xf32, #tpu.memory_space<vmem>>, vector<32x32xf32>
    %cst_20 = arith.constant dense<0.000000e+00> : vector<8x32xf32>
    %46 = tpu.matmul %44, %45, %cst_20 {dimension_numbers = #tpu.dot_dimension_numbers<[1], [0], [0], [1], [0, 0, 1, 1], [], []>} : vector<8x32xf32>, vector<32x32xf32>, vector<8x32xf32> -> vector<8x32xf32>
    %47 = vector.broadcast %5 : vector<1x32xf32> to vector<8x32xf32>
    %48 = arith.addf %46, %47 : vector<8x32xf32>
    %49 = math.tanh %48 : vector<8x32xf32>
    %c128 = arith.constant 128 : index
    %c0_21 = arith.constant 0 : index
    %50 = vector.load %arg2[%c128, %c0_21] : memref<168x64xf32, #tpu.memory_space<vmem>>, vector<32x4xf32>
    %cst_22 = arith.constant dense<0.000000e+00> : vector<8x4xf32>
    %51 = tpu.matmul %49, %50, %cst_22 {dimension_numbers = #tpu.dot_dimension_numbers<[1], [0], [0], [1], [0, 0, 1, 1], [], []>} : vector<8x32xf32>, vector<32x4xf32>, vector<8x4xf32> -> vector<8x4xf32>
    %52 = vector.broadcast %6 : vector<1x4xf32> to vector<8x4xf32>
    %53 = arith.addf %51, %52 : vector<8x4xf32>
    %cst_23 = arith.constant 0.000000e+00 : f32
    %54 = vector.broadcast %cst_23 : f32 to vector<8x108xf32>
    %55 = tpu.concatenate %53, %22, %38, %54 in 1 : vector<8x4xf32>, vector<8x8xf32>, vector<8x8xf32>, vector<8x108xf32> -> vector<8x128xf32>
    %c0_24 = arith.constant 0 : index
    %c0_25 = arith.constant 0 : index
    %56 = vector.load %arg3[%c0_24, %c0_25] : memref<8x128xf32, #tpu.memory_space<vmem>>, vector<8x128xf32>
    tpu.vector_store %arg3[%c0_24, %c0_25], %55 {strides = array<i32>} : memref<8x128xf32, #tpu.memory_space<vmem>>, vector<8x128xf32>,
    return
  }
  func.func @transform_0(%arg0: i32) -> (i32, i32) {
    %c0_i32 = arith.constant 0 : i32
    %c0_i32_0 = arith.constant 0 : i32
    return %arg0, %c0_i32 : i32, i32
  }
  func.func @transform_1(%arg0: i32) -> (i32, i32) {
    %c0_i32 = arith.constant 0 : i32
    %c0_i32_0 = arith.constant 0 : i32
    %c0_i32_1 = arith.constant 0 : i32
    return %c0_i32, %c0_i32_0 : i32, i32
  }
  func.func @transform_2(%arg0: i32) -> (i32, i32) {
    %c0_i32 = arith.constant 0 : i32
    %c0_i32_0 = arith.constant 0 : i32
    return %arg0, %c0_i32 : i32, i32
  }
}

</mosaic_0001>

<llo_original>
// kernel: tpu_custom_call.1
$region0: #{tpu_custom_call.1}
  #allocation0 [shape = 'u32[]', space=smem, size = 0x4, offset = 0x4, fixed_abs, tag = 'smem constant byte address 0x4 - core index']
  #allocation1 [shape = 'u32[144,128]{1,0:T(1,128)}', space=vmem, size = 0x12000, scoped, tag = 'internal scratch']
  %s0 = inlined_call_operand.vmem [shape: f32[8,24], index: 0, kind: input, shape index: {}]
  %s1 = inlined_call_operand.vmem [shape: f32[168,64], index: 1, kind: input, shape index: {}]
  %s2 = inlined_call_operand.hbm [shape: f32[8,128], index: 2, kind: output, shape index: {}]
  %s3 = sld [smem:[#allocation0]]
  $region18: #{tpu_custom_call.1} parent=0
    _
  %s5 = ssub.s32 1, %s3
  %s6 = scalar_select 0, %s5, %s3
  $region1: #{tpu_custom_call.1} parent=0
    #allocation2 [shape = 'u8[4096]{0}', space=vmem, size = 0x1000, scoped, tag = 'output window, operand 0, single buffered']
    #allocation3 [shape = 's32[1]{0}', space=sflag, size = 0x4, scoped, tag = 'scoped memory for tpu_custom_call.1']
    %7 = vsyncpa [#allocation3], 0
    // Predicated region
    $region2: #{tpu_custom_call.1} parent=1 // pred_check
      _
    $region3: #{tpu_custom_call.1} parent=1 // pred_check_branch
      %9 = sbr.rel (0) target = $region5
    $region4: #{tpu_custom_call.1} parent=1 // pred_region
      _
    $region5: #{tpu_custom_call.1} parent=1 // pred_fallthru
      _
    // Predicated region
    $region6: #{tpu_custom_call.1} parent=1 // pred_check
      _
    $region7: #{tpu_custom_call.1} parent=1 // pred_check_branch
      %11 = sbr.rel (0) target = $region9
    $region8: #{tpu_custom_call.1} parent=1 // pred_region
      _
    $region9: #{tpu_custom_call.1} parent=1 // pred_fallthru
      _
    %v12 = vld [vmem:[%s0] sm:$0xff]
    %v13 = vld [vmem:[%s1 + $0xa0] sm:$0x1]
    %v14 = vld [vmem:[%s1 + $0xa1] sm:$0x1]
    %v15 = vld [vmem:[%s1 + $0xa2] sm:$0x1]
    %v16 = vld [vmem:[%s1 + $0xa3] sm:$0x1]
    %v17 = vld [vmem:[%s1 + $0xa4] sm:$0x1]
    %v18 = vld [vmem:[%s1 + $0xa5] sm:$0x1]
    %v19 = vld [vmem:[%s1] sm:$0xff]
    %v20 = vld [vmem:[%s1 + $0x8] sm:$0xff]
    %v21 = vld [vmem:[%s1 + $0x10] sm:$0xff]
    %vm22 = vcmask 195584
    %v24 = vsel %vm22, %v12, 0
    %26 = vmatprep.subr.mxu0 0.0
    %27 = vmatpush1.msra.mxu0 %v19
    %28 = vmatprep.subr.mxu0 0.0
    %29 = vmatpush1.msra.mxu0 %v20
    %30 = vmatprep.subr.mxu0 0.0
    %31 = vmatpush1.msra.mxu0 %v21
    %32 = vmatprep.subr.mxu0 0.0
    %33 = vmatpush1.msra.mxu0 0.0
    %34 = vmatprep.subr.mxu0 0.0
    %35 = vmatpush1.msra.mxu0 0.0
    %36 = vmatprep.subr.mxu0 0.0
    %37 = vmatpush1.msra.mxu0 0.0
    %38 = vmatprep.subr.mxu0 0.0
    %39 = vmatpush1.msra.mxu0 0.0
    %40 = vmatprep.subr.mxu0 0.0
    %41 = vmatpush1.msra.mxu0 0.0
    %42 = vmatprep.subr.mxu0 0.0
    %43 = vmatpush1.msra.mxu0 0.0
    %44 = vmatprep.subr.mxu0 0.0
    %45 = vmatpush1.msra.mxu0 0.0
    %46 = vmatprep.subr.mxu0 0.0
    %47 = vmatpush1.msra.mxu0 0.0
    %48 = vmatprep.subr.mxu0 0.0
    %49 = vmatpush1.msra.mxu0 0.0
    %50 = vmatprep.subr.mxu0 0.0
    %51 = vmatpush1.msra.mxu0 0.0
    %52 = vmatprep.subr.mxu0 0.0
    %53 = vmatpush1.msra.mxu0 0.0
    %54 = vmatprep.subr.mxu0 0.0
    %55 = vmatpush1.msra.mxu0 0.0
    %56 = vmatprep.subr.mxu0 0.0
    %57 = vmatpush1.msra.mxu0 0.0
    %58 = vmatprep.subr.mxu0 0.0
    %59 = vmatpush1.msra.mxu0 0.0
    %60 = vmatprep.subr.mxu0 0.0
    %61 = vmatpush1.msra.mxu0 0.0
    %62 = vmatprep.subr.mxu0 0.0
    %63 = vmatpush1.msra.mxu0 0.0
    %64 = vmatprep.subr.mxu0 0.0
    %65 = vmatpush1.msra.mxu0 0.0
    %66 = vmatprep.subr.mxu0 0.0
    %67 = vmatpush1.msra.mxu0 0.0
    %68 = vmatprep.subr.mxu0 0.0
    %69 = vmatpush1.msra.mxu0 0.0
    %70 = vmatprep.subr.mxu0 0.0
    %71 = vmatpush1.msra.mxu0 0.0
    %72 = vmatprep.subr.mxu0 0.0
    %73 = vmatpush1.msra.mxu0 0.0
    %74 = vmatprep.subr.mxu0 0.0
    %75 = vmatpush1.msra.mxu0 0.0
    %76 = vmatprep.subr.mxu0 0.0
    %77 = vmatpush1.msra.mxu0 0.0
    %78 = vmatprep.subr.mxu0 0.0
    %79 = vmatpush1.msra.mxu0 0.0
    %80 = vmatprep.subr.mxu0 0.0
    %81 = vmatpush1.msra.mxu0 0.0
    %82 = vmatprep.subr.mxu0 0.0
    %83 = vmatpush1.msra.mxu0 0.0
    %84 = vmatprep.subr.mxu0 0.0
    %85 = vmatpush1.msra.mxu0 0.0
    %86 = vmatprep.subr.mxu0 0.0
    %87 = vmatpush1.msra.mxu0 0.0
    %88 = vmatprep.subr.mxu0 0.0
    %89 = vmatpush1.msra.mxu0 0.0
    %90 = vmatprep.mubr.f32.mxu0 0.0
    %91 = vmatmul.mubr.f32.gmra.mrb[0].mxu0 %v24
    %v92 = vpop.f32.mrb[0].mxu0
    %v93 = vadd.f32 0.0, %v92
    %v94 = vpop.f32.mrb[0].mxu0
    %95 = vdwg.mxu0
    %v96 = vlaneseq
    %v97 = vshrl.u32 %v96, 7
    %v98 = vsub.s32 0, %v97
    %v99 = vrot.slane %v13, %v98
    %v100 = vadd.f32 %v93, %v99
    %v101 = vtanh.pop %v100
    %v102 = vld [vmem:[%s1 + $0x20] sm:$0xff]
    %v103 = vld [vmem:[%s1 + $0x28] sm:$0xff]
    %v104 = vld [vmem:[%s1 + $0x30] sm:$0xff]
    %v105 = vld [vmem:[%s1 + $0x38] sm:$0xff]
    %v106 = vlaneseq
    %v107 = vshrl.u32 %v106, 7
    %v108 = vsub.s32 0, %v107
    %v109 = vrot.slane %v14, %v108
    %vm110 = vcmask 261120
    %v112 = vsel %vm110, %v101, 0
    %114 = vmatprep.subr.mxu0 0.0
    %115 = vmatpush1.msra.mxu0 %v102
    %116 = vmatprep.subr.mxu0 0.0
    %117 = vmatpush1.msra.mxu0 %v103
    %118 = vmatprep.subr.mxu0 0.0
    %119 = vmatpush1.msra.mxu0 %v104
    %120 = vmatprep.subr.mxu0 0.0
    %121 = vmatpush1.msra.mxu0 %v105
    %122 = vmatprep.subr.mxu0 0.0
    %123 = vmatpush1.msra.mxu0 0.0
    %124 = vmatprep.subr.mxu0 0.0
    %125 = vmatpush1.msra.mxu0 0.0
    %126 = vmatprep.subr.mxu0 0.0
    %127 = vmatpush1.msra.mxu0 0.0
    %128 = vmatprep.subr.mxu0 0.0
    %129 = vmatpush1.msra.mxu0 0.0
    %130 = vmatprep.subr.mxu0 0.0
    %131 = vmatpush1.msra.mxu0 0.0
    %132 = vmatprep.subr.mxu0 0.0
    %133 = vmatpush1.msra.mxu0 0.0
    %134 = vmatprep.subr.mxu0 0.0
    %135 = vmatpush1.msra.mxu0 0.0
    %136 = vmatprep.subr.mxu0 0.0
    %137 = vmatpush1.msra.mxu0 0.0
    %138 = vmatprep.subr.mxu0 0.0
    %139 = vmatpush1.msra.mxu0 0.0
    %140 = vmatprep.subr.mxu0 0.0
    %141 = vmatpush1.msra.mxu0 0.0
    %142 = vmatprep.subr.mxu0 0.0
    %143 = vmatpush1.msra.mxu0 0.0
    %144 = vmatprep.subr.mxu0 0.0
    %145 = vmatpush1.msra.mxu0 0.0
    %146 = vmatprep.subr.mxu0 0.0
    %147 = vmatpush1.msra.mxu0 0.0
    %148 = vmatprep.subr.mxu0 0.0
    %149 = vmatpush1.msra.mxu0 0.0
    %150 = vmatprep.subr.mxu0 0.0
    %151 = vmatpush1.msra.mxu0 0.0
    %152 = vmatprep.subr.mxu0 0.0
    %153 = vmatpush1.msra.mxu0 0.0
    %154 = vmatprep.subr.mxu0 0.0
    %155 = vmatpush1.msra.mxu0 0.0
    %156 = vmatprep.subr.mxu0 0.0
    %157 = vmatpush1.msra.mxu0 0.0
    %158 = vmatprep.subr.mxu0 0.0
    %159 = vmatpush1.msra.mxu0 0.0
    %160 = vmatprep.subr.mxu0 0.0
    %161 = vmatpush1.msra.mxu0 0.0
    %162 = vmatprep.subr.mxu0 0.0
    %163 = vmatpush1.msra.mxu0 0.0
    %164 = vmatprep.subr.mxu0 0.0
    %165 = vmatpush1.msra.mxu0 0.0
    %166 = vmatprep.subr.mxu0 0.0
    %167 = vmatpush1.msra.mxu0 0.0
    %168 = vmatprep.subr.mxu0 0.0
    %169 = vmatpush1.msra.mxu0 0.0
    %170 = vmatprep.subr.mxu0 0.0
    %171 = vmatpush1.msra.mxu0 0.0
    %172 = vmatprep.subr.mxu0 0.0
    %173 = vmatpush1.msra.mxu0 0.0
    %174 = vmatprep.subr.mxu0 0.0
    %175 = vmatpush1.msra.mxu0 0.0
    %176 = vmatprep.subr.mxu0 0.0
    %177 = vmatpush1.msra.mxu0 0.0
    %178 = vmatprep.mubr.f32.mxu0 0.0
    %179 = vmatmul.mubr.f32.gmra.mrb[0].mxu0 %v112
    %v180 = vpop.f32.mrb[0].mxu0
    %v181 = vadd.f32 %v109, %v180
    %v182 = vpop.f32.mrb[0].mxu0
    %183 = vdwg.mxu0
    %v184 = vtanh.pop %v181
    %v185 = vld [vmem:[%s1 + $0x60] sm:$0xff]
    %v186 = vld [vmem:[%s1 + $0x68] sm:$0xff]
    %v187 = vld [vmem:[%s1 + $0x70] sm:$0xff]
    %v188 = vld [vmem:[%s1 + $0x78] sm:$0xff]
    %v189 = vlaneseq
    %v190 = vshrl.u32 %v189, 7
    %v191 = vsub.s32 0, %v190
    %v192 = vrot.slane %v15, %v191
    %v194 = vsel %vm110, %v184, 0
    %196 = vmatprep.subr.mxu0 0.0
    %197 = vmatpush1.msra.mxu0 %v185
    %198 = vmatprep.subr.mxu0 0.0
    %199 = vmatpush1.msra.mxu0 %v186
    %200 = vmatprep.subr.mxu0 0.0
    %201 = vmatpush1.msra.mxu0 %v187
    %202 = vmatprep.subr.mxu0 0.0
    %203 = vmatpush1.msra.mxu0 %v188
    %204 = vmatprep.subr.mxu0 0.0
    %205 = vmatpush1.msra.mxu0 0.0
    %206 = vmatprep.subr.mxu0 0.0
    %207 = vmatpush1.msra.mxu0 0.0
    %208 = vmatprep.subr.mxu0 0.0
    %209 = vmatpush1.msra.mxu0 0.0
    %210 = vmatprep.subr.mxu0 0.0
    %211 = vmatpush1.msra.mxu0 0.0
    %212 = vmatprep.subr.mxu0 0.0
    %213 = vmatpush1.msra.mxu0 0.0
    %214 = vmatprep.subr.mxu0 0.0
    %215 = vmatpush1.msra.mxu0 0.0
    %216 = vmatprep.subr.mxu0 0.0
    %217 = vmatpush1.msra.mxu0 0.0
    %218 = vmatprep.subr.mxu0 0.0
    %219 = vmatpush1.msra.mxu0 0.0
    %220 = vmatprep.subr.mxu0 0.0
    %221 = vmatpush1.msra.mxu0 0.0
    %222 = vmatprep.subr.mxu0 0.0
    %223 = vmatpush1.msra.mxu0 0.0
    %224 = vmatprep.subr.mxu0 0.0
    %225 = vmatpush1.msra.mxu0 0.0
    %226 = vmatprep.subr.mxu0 0.0
    %227 = vmatpush1.msra.mxu0 0.0
    %228 = vmatprep.subr.mxu0 0.0
    %229 = vmatpush1.msra.mxu0 0.0
    %230 = vmatprep.subr.mxu0 0.0
    %231 = vmatpush1.msra.mxu0 0.0
    %232 = vmatprep.subr.mxu0 0.0
    %233 = vmatpush1.msra.mxu0 0.0
    %234 = vmatprep.subr.mxu0 0.0
    %235 = vmatpush1.msra.mxu0 0.0
    %236 = vmatprep.subr.mxu0 0.0
    %237 = vmatpush1.msra.mxu0 0.0
    %238 = vmatprep.subr.mxu0 0.0
    %239 = vmatpush1.msra.mxu0 0.0
    %240 = vmatprep.subr.mxu0 0.0
    %241 = vmatpush1.msra.mxu0 0.0
    %242 = vmatprep.subr.mxu0 0.0
    %243 = vmatpush1.msra.mxu0 0.0
    %244 = vmatprep.subr.mxu0 0.0
    %245 = vmatpush1.msra.mxu0 0.0
    %246 = vmatprep.subr.mxu0 0.0
    %247 = vmatpush1.msra.mxu0 0.0
    %248 = vmatprep.subr.mxu0 0.0
    %249 = vmatpush1.msra.mxu0 0.0
    %250 = vmatprep.subr.mxu0 0.0
    %251 = vmatpush1.msra.mxu0 0.0
    %252 = vmatprep.subr.mxu0 0.0
    %253 = vmatpush1.msra.mxu0 0.0
    %254 = vmatprep.subr.mxu0 0.0
    %255 = vmatpush1.msra.mxu0 0.0
    %256 = vmatprep.subr.mxu0 0.0
    %257 = vmatpush1.msra.mxu0 0.0
    %258 = vmatprep.subr.mxu0 0.0
    %259 = vmatpush1.msra.mxu0 0.0
    %260 = vmatprep.mubr.f32.mxu0 0.0
    %261 = vmatmul.mubr.f32.gmra.mrb[0].mxu0 %v194
    %v262 = vpop.f32.mrb[0].mxu0
    %v263 = vadd.f32 %v192, %v262
    %v264 = vpop.f32.mrb[0].mxu0
    %265 = vdwg.mxu0
    %v266 = vmul.f32 %v263, 0.2
    %vm267 = vcmask 64512
    %v268 = vsel %vm267, %v266, -inf
    %269 = vmax.xlane.f32.xlu0 %v268
    %v270 = vpop.xlane.xlu0 %269
    %v271 = vsub.f32 %v266, %v270
    %v272 = vmul.f32 %v271, 1.442695
    %v273 = vpow.pop %v272
    %v274 = vsel %vm267, %v273, 0.0
    %275 = vadd.xlane.f32.xlu0 %v274
    %v276 = vpop.xlane.xlu0 %275
    %v277 = vrcp.pop %v276
    %v278 = vmul.f32 %v276, %v277
    %v279 = vsub.f32 2.0, %v278
    %v280 = vmul.f32 %v277, %v279
    %v281 = vmul.f32 %v273, %v280
    %v282 = vld [vmem:[%s1 + $0x18] sm:$0xff]
    %v284 = vsel %vm267, %v281, 0
    %286 = vmatprep.subr.mxu0 0.0
    %287 = vmatpush1.msra.mxu0 %v282
    %288 = vmatprep.subr.mxu0 0.0
    %289 = vmatpush1.msra.mxu0 0.0
    %290 = vmatprep.subr.mxu0 0.0
    %291 = vmatpush1.msra.mxu0 0.0
    %292 = vmatprep.subr.mxu0 0.0
    %293 = vmatpush1.msra.mxu0 0.0
    %294 = vmatprep.subr.mxu0 0.0
    %295 = vmatpush1.msra.mxu0 0.0
    %296 = vmatprep.subr.mxu0 0.0
    %297 = vmatpush1.msra.mxu0 0.0
    %298 = vmatprep.subr.mxu0 0.0
    %299 = vmatpush1.msra.mxu0 0.0
    %300 = vmatprep.subr.mxu0 0.0
    %301 = vmatpush1.msra.mxu0 0.0
    %302 = vmatprep.subr.mxu0 0.0
    %303 = vmatpush1.msra.mxu0 0.0
    %304 = vmatprep.subr.mxu0 0.0
    %305 = vmatpush1.msra.mxu0 0.0
    %306 = vmatprep.subr.mxu0 0.0
    %307 = vmatpush1.msra.mxu0 0.0
    %308 = vmatprep.subr.mxu0 0.0
    %309 = vmatpush1.msra.mxu0 0.0
    %310 = vmatprep.subr.mxu0 0.0
    %311 = vmatpush1.msra.mxu0 0.0
    %312 = vmatprep.subr.mxu0 0.0
    %313 = vmatpush1.msra.mxu0 0.0
    %314 = vmatprep.subr.mxu0 0.0
    %315 = vmatpush1.msra.mxu0 0.0
    %316 = vmatprep.subr.mxu0 0.0
    %317 = vmatpush1.msra.mxu0 0.0
    %318 = vmatprep.subr.mxu0 0.0
    %319 = vmatpush1.msra.mxu0 0.0
    %320 = vmatprep.subr.mxu0 0.0
    %321 = vmatpush1.msra.mxu0 0.0
    %322 = vmatprep.subr.mxu0 0.0
    %323 = vmatpush1.msra.mxu0 0.0
    %324 = vmatprep.subr.mxu0 0.0
    %325 = vmatpush1.msra.mxu0 0.0
    %326 = vmatprep.subr.mxu0 0.0
    %327 = vmatpush1.msra.mxu0 0.0
    %328 = vmatprep.subr.mxu0 0.0
    %329 = vmatpush1.msra.mxu0 0.0
    %330 = vmatprep.subr.mxu0 0.0
    %331 = vmatpush1.msra.mxu0 0.0
    %332 = vmatprep.subr.mxu0 0.0
    %333 = vmatpush1.msra.mxu0 0.0
    %334 = vmatprep.subr.mxu0 0.0
    %335 = vmatpush1.msra.mxu0 0.0
    %336 = vmatprep.subr.mxu0 0.0
    %337 = vmatpush1.msra.mxu0 0.0
    %338 = vmatprep.subr.mxu0 0.0
    %339 = vmatpush1.msra.mxu0 0.0
    %340 = vmatprep.subr.mxu0 0.0
    %341 = vmatpush1.msra.mxu0 0.0
    %342 = vmatprep.subr.mxu0 0.0
    %343 = vmatpush1.msra.mxu0 0.0
    %344 = vmatprep.subr.mxu0 0.0
    %345 = vmatpush1.msra.mxu0 0.0
    %346 = vmatprep.subr.mxu0 0.0
    %347 = vmatpush1.msra.mxu0 0.0
    %348 = vmatprep.subr.mxu0 0.0
    %349 = vmatpush1.msra.mxu0 0.0
    %350 = vmatprep.mubr.f32.mxu0 0.0
    %351 = vmatmul.mubr.f32.gmra.mrb[0].mxu0 %v284
    %v352 = vpop.f32.mrb[0].mxu0
    %v353 = vadd.f32 0.0, %v352
    %v354 = vpop.f32.mrb[0].mxu0
    %355 = vdwg.mxu0
    %357 = vrot.lane.b32.xlu0 %v353, 32
    %v358 = vpop.permute.xlu0 %357
    %v360 = vadd.f32 %v93, %v358
    %v361 = vlaneseq
    %v362 = vshrl.u32 %v361, 7
    %v363 = vsub.s32 0, %v362
    %v364 = vrot.slane %v16, %v363
    %366 = vrot.lane.b32.xlu0 %v364, 32
    %v367 = vpop.permute.xlu0 %366
    %v369 = vadd.f32 %v360, %v367
    %v370 = vtanh.pop %v369
    %v371 = vld [vmem:[%s1 + $0x40] sm:$0xff]
    %v372 = vld [vmem:[%s1 + $0x48] sm:$0xff]
    %v373 = vld [vmem:[%s1 + $0x50] sm:$0xff]
    %v374 = vld [vmem:[%s1 + $0x58] sm:$0xff]
    %v375 = vlaneseq
    %v376 = vshrl.u32 %v375, 7
    %v377 = vsub.s32 0, %v376
    %v378 = vrot.slane %v17, %v377
    %380 = vrot.lane.b32.xlu0 %v370, 96
    %v381 = vpop.permute.xlu0 %380
    %v382 = vsel %vm110, %v381, 0
    %384 = vmatprep.subr.mxu0 0.0
    %385 = vmatpush1.msra.mxu0 %v371
    %386 = vmatprep.subr.mxu0 0.0
    %387 = vmatpush1.msra.mxu0 %v372
    %388 = vmatprep.subr.mxu0 0.0
    %389 = vmatpush1.msra.mxu0 %v373
    %390 = vmatprep.subr.mxu0 0.0
    %391 = vmatpush1.msra.mxu0 %v374
    %392 = vmatprep.subr.mxu0 0.0
    %393 = vmatpush1.msra.mxu0 0.0
    %394 = vmatprep.subr.mxu0 0.0
    %395 = vmatpush1.msra.mxu0 0.0
    %396 = vmatprep.subr.mxu0 0.0
    %397 = vmatpush1.msra.mxu0 0.0
    %398 = vmatprep.subr.mxu0 0.0
    %399 = vmatpush1.msra.mxu0 0.0
    %400 = vmatprep.subr.mxu0 0.0
    %401 = vmatpush1.msra.mxu0 0.0
    %402 = vmatprep.subr.mxu0 0.0
    %403 = vmatpush1.msra.mxu0 0.0
    %404 = vmatprep.subr.mxu0 0.0
    %405 = vmatpush1.msra.mxu0 0.0
    %406 = vmatprep.subr.mxu0 0.0
    %407 = vmatpush1.msra.mxu0 0.0
    %408 = vmatprep.subr.mxu0 0.0
    %409 = vmatpush1.msra.mxu0 0.0
    %410 = vmatprep.subr.mxu0 0.0
    %411 = vmatpush1.msra.mxu0 0.0
    %412 = vmatprep.subr.mxu0 0.0
    %413 = vmatpush1.msra.mxu0 0.0
    %414 = vmatprep.subr.mxu0 0.0
    %415 = vmatpush1.msra.mxu0 0.0
    %416 = vmatprep.subr.mxu0 0.0
    %417 = vmatpush1.msra.mxu0 0.0
    %418 = vmatprep.subr.mxu0 0.0
    %419 = vmatpush1.msra.mxu0 0.0
    %420 = vmatprep.subr.mxu0 0.0
    %421 = vmatpush1.msra.mxu0 0.0
    %422 = vmatprep.subr.mxu0 0.0
    %423 = vmatpush1.msra.mxu0 0.0
    %424 = vmatprep.subr.mxu0 0.0
    %425 = vmatpush1.msra.mxu0 0.0
    %426 = vmatprep.subr.mxu0 0.0
    %427 = vmatpush1.msra.mxu0 0.0
    %428 = vmatprep.subr.mxu0 0.0
    %429 = vmatpush1.msra.mxu0 0.0
    %430 = vmatprep.subr.mxu0 0.0
    %431 = vmatpush1.msra.mxu0 0.0
    %432 = vmatprep.subr.mxu0 0.0
    %433 = vmatpush1.msra.mxu0 0.0
    %434 = vmatprep.subr.mxu0 0.0
    %435 = vmatpush1.msra.mxu0 0.0
    %436 = vmatprep.subr.mxu0 0.0
    %437 = vmatpush1.msra.mxu0 0.0
    %438 = vmatprep.subr.mxu0 0.0
    %439 = vmatpush1.msra.mxu0 0.0
    %440 = vmatprep.subr.mxu0 0.0
    %441 = vmatpush1.msra.mxu0 0.0
    %442 = vmatprep.subr.mxu0 0.0
    %443 = vmatpush1.msra.mxu0 0.0
    %444 = vmatprep.subr.mxu0 0.0
    %445 = vmatpush1.msra.mxu0 0.0
    %446 = vmatprep.subr.mxu0 0.0
    %447 = vmatpush1.msra.mxu0 0.0
    %448 = vmatprep.mubr.f32.mxu0 0.0
    %449 = vmatmul.mubr.f32.gmra.mrb[0].mxu0 %v382
    %v450 = vpop.f32.mrb[0].mxu0
    %v451 = vadd.f32 %v378, %v450
    %v452 = vpop.f32.mrb[0].mxu0
    %453 = vdwg.mxu0
    %v454 = vtanh.pop %v451
    %v455 = vld [vmem:[%s1 + $0x80] sm:$0xff]
    %v456 = vld [vmem:[%s1 + $0x88] sm:$0xff]
    %v457 = vld [vmem:[%s1 + $0x90] sm:$0xff]
    %v458 = vld [vmem:[%s1 + $0x98] sm:$0xff]
    %v459 = vlaneseq
    %v460 = vshrl.u32 %v459, 7
    %v461 = vsub.s32 0, %v460
    %v462 = vrot.slane %v18, %v461
    %v464 = vsel %vm110, %v454, 0
    %466 = vmatprep.subr.mxu0 0.0
    %467 = vmatpush1.msra.mxu0 %v455
    %468 = vmatprep.subr.mxu0 0.0
    %469 = vmatpush1.msra.mxu0 %v456
    %470 = vmatprep.subr.mxu0 0.0
    %471 = vmatpush1.msra.mxu0 %v457
    %472 = vmatprep.subr.mxu0 0.0
    %473 = vmatpush1.msra.mxu0 %v458
    %474 = vmatprep.subr.mxu0 0.0
    %475 = vmatpush1.msra.mxu0 0.0
    %476 = vmatprep.subr.mxu0 0.0
    %477 = vmatpush1.msra.mxu0 0.0
    %478 = vmatprep.subr.mxu0 0.0
    %479 = vmatpush1.msra.mxu0 0.0
    %480 = vmatprep.subr.mxu0 0.0
    %481 = vmatpush1.msra.mxu0 0.0
    %482 = vmatprep.subr.mxu0 0.0
    %483 = vmatpush1.msra.mxu0 0.0
    %484 = vmatprep.subr.mxu0 0.0
    %485 = vmatpush1.msra.mxu0 0.0
    %486 = vmatprep.subr.mxu0 0.0
    %487 = vmatpush1.msra.mxu0 0.0
    %488 = vmatprep.subr.mxu0 0.0
    %489 = vmatpush1.msra.mxu0 0.0
    %490 = vmatprep.subr.mxu0 0.0
    %491 = vmatpush1.msra.mxu0 0.0
    %492 = vmatprep.subr.mxu0 0.0
    %493 = vmatpush1.msra.mxu0 0.0
    %494 = vmatprep.subr.mxu0 0.0
    %495 = vmatpush1.msra.mxu0 0.0
    %496 = vmatprep.subr.mxu0 0.0
    %497 = vmatpush1.msra.mxu0 0.0
    %498 = vmatprep.subr.mxu0 0.0
    %499 = vmatpush1.msra.mxu0 0.0
    %500 = vmatprep.subr.mxu0 0.0
    %501 = vmatpush1.msra.mxu0 0.0
    %502 = vmatprep.subr.mxu0 0.0
    %503 = vmatpush1.msra.mxu0 0.0
    %504 = vmatprep.subr.mxu0 0.0
    %505 = vmatpush1.msra.mxu0 0.0
    %506 = vmatprep.subr.mxu0 0.0
    %507 = vmatpush1.msra.mxu0 0.0
    %508 = vmatprep.subr.mxu0 0.0
    %509 = vmatpush1.msra.mxu0 0.0
    %510 = vmatprep.subr.mxu0 0.0
    %511 = vmatpush1.msra.mxu0 0.0
    %512 = vmatprep.subr.mxu0 0.0
    %513 = vmatpush1.msra.mxu0 0.0
    %514 = vmatprep.subr.mxu0 0.0
    %515 = vmatpush1.msra.mxu0 0.0
    %516 = vmatprep.subr.mxu0 0.0
    %517 = vmatpush1.msra.mxu0 0.0
    %518 = vmatprep.subr.mxu0 0.0
    %519 = vmatpush1.msra.mxu0 0.0
    %520 = vmatprep.subr.mxu0 0.0
    %521 = vmatpush1.msra.mxu0 0.0
    %522 = vmatprep.subr.mxu0 0.0
    %523 = vmatpush1.msra.mxu0 0.0
    %524 = vmatprep.subr.mxu0 0.0
    %525 = vmatpush1.msra.mxu0 0.0
    %526 = vmatprep.subr.mxu0 0.0
    %527 = vmatpush1.msra.mxu0 0.0
    %528 = vmatprep.subr.mxu0 0.0
    %529 = vmatpush1.msra.mxu0 0.0
    %530 = vmatprep.mubr.f32.mxu0 0.0
    %531 = vmatmul.mubr.f32.gmra.mrb[0].mxu0 %v464
    %v532 = vpop.f32.mrb[0].mxu0
    %v533 = vadd.f32 %v462, %v532
    %v534 = vpop.f32.mrb[0].mxu0
    %535 = vdwg.mxu0
    %537 = vrot.lane.b32.xlu0 %v263, 4
    %v538 = vpop.permute.xlu0 %537
    %540 = vrot.lane.b32.xlu0 %v281, 12
    %v541 = vpop.permute.xlu0 %540
    %vm543 = vcmask 31744
    %v544 = vsel %vm543, %v533, %v538
    %vm545 = vcmask 97280
    %v546 = vsel %vm545, %v544, %v541
    %vm547 = vcmask 162816
    %v548 = vsel %vm547, %v546, 0.0
    %549 = vst [vmem:[#allocation2] sm:$0xff] %v548
    // Predicated region
    $region10: #{tpu_custom_call.1} parent=1 // pred_check
      _
    $region11: #{tpu_custom_call.1} parent=1 // pred_check_branch
      %551 = sbr.rel (0) target = $region13
    $region12: #{tpu_custom_call.1} parent=1 // pred_region
      %s553 = ssub.s32 128, 128
      %554 = vsyncadd [#allocation3], %s553
      %s556 = sshll.u32 [#allocation2], 4
      %s557 = int_to_ptr.vmem [resolvable:$true] %s556
      %559 = dma.vmem_to_hbm [thread:$0]  %s557, 128, %s2, [#allocation3]
    $region13: #{tpu_custom_call.1} parent=1 // pred_fallthru
      _
    // Predicated region
    $region14: #{tpu_custom_call.1} parent=1 // pred_check
      _
    $region15: #{tpu_custom_call.1} parent=1 // pred_check_branch
      %561 = sbr.rel (0) target = $region17
    $region16: #{tpu_custom_call.1} parent=1 // pred_region
      %562 = dma.done [#allocation3], 128
    $region17: #{tpu_custom_call.1} parent=1 // pred_fallthru
      _
    %563 = vsyncpa [#allocation3], 1

</llo_original>
